<compile_context>
chip_gen: v5e
topology: v5e:2x2
jax: 0.10.0
libtpu: 0.0.40
codegen_flags: <defaults>
</compile_context>

<pallas_src>
import math

import jax
import jax.numpy as jnp
import numpy as np
from jax.experimental import pallas as pl
from jax.experimental.pallas import tpu as pltpu


def _combine_kernel(ids_ref, tok_hbm, pos_ref, o_ref, gather, sem):
    """One grid step = (batch b, TS-token sequence chunk c).

    ids_ref : [B, S] int32 token ids, scalar-prefetched into SMEM.
    tok_hbm : [V, D] embedding table left in HBM (memory_space=pl.ANY).
    pos_ref : [TS, D] positional-embedding chunk for this sequence chunk (VMEM).
    o_ref   : [1, TS, D] output tile (VMEM).
    gather  : [TS, D] VMEM scratch receiving the gathered token rows.
    sem     : (1,) DMA semaphore shared by the TS row copies.
    """
    b = pl.program_id(0)
    c = pl.program_id(1)
    ts = gather.shape[0]
    vocab = tok_hbm.shape[0]
    base = c * ts

    # Issue all TS row-DMAs back to back so they are all in flight at once.
    @pl.loop(0, ts)
    def _issue(i):
        idx = ids_ref[b, base + i]
        idx = jnp.minimum(jnp.maximum(idx, 0), vocab - 1)  # clamp OOB token ids
        pltpu.make_async_copy(
            tok_hbm.at[pl.ds(idx, 1), :],
            gather.at[pl.ds(i, 1), :],
            sem.at[0],
        ).start()

    # Wait for every row copy (each wait consumes exactly one row-sized arrival).
    @pl.loop(0, ts)
    def _drain(i):
        pltpu.make_async_copy(
            tok_hbm.at[pl.ds(0, 1), :],
            gather.at[pl.ds(i, 1), :],
            sem.at[0],
        ).wait()

    # Single dense (TS, D) vectorized add and lane/sublane-dense store.
    o_ref[0] = (gather[...] + pos_ref[...]).astype(o_ref.dtype)


def _pick_chunk(seq_len, hidden, itemsize, max_chunk=256, vmem_budget=24 << 20):
    """Largest multiple-of-8 divisor of seq_len that fits the VMEM buffer budget."""
    # Budget covers: pos tile (x2 pipeline bufs) + out tile (x2) + gather scratch.
    per_row = 5 * hidden * itemsize
    cap = max(8, min(max_chunk, (vmem_budget // per_row) // 8 * 8))
    best = None
    for ts in range(8, cap + 1, 8):
        if seq_len % ts == 0:
            best = ts
    if best is not None:
        return best
    return seq_len  # short / odd sequences: one chunk == full sequence


def combine_embedding(ids, token_table, pos_table, *, max_chunk=256):
    """ids: [B, S] int; token_table: [V, D]; pos_table: [max_len, D] -> [B, S, D]."""
    B, S = ids.shape
    V, D = token_table.shape
    if pos_table.shape[0] < S:
        raise ValueError(
            f"pos_table supports only {pos_table.shape[0]} positions < sequence {S}")
    if pos_table.shape[1] != D:
        raise ValueError("hidden-size mismatch between token and positional tables")

    out_dtype = token_table.dtype
    itemsize = jnp.dtype(out_dtype).itemsize
    ids = ids.astype(jnp.int32)
    pos = pos_table[:S].astype(out_dtype)          # [S, D], dtype-matched once

    TS = _pick_chunk(S, D, itemsize, max_chunk=max_chunk)
    n_chunks = S // TS

    # VMEM budget: 2 pipeline buffers each for the pos and out tiles + gather scratch.
    need = 5 * TS * D * itemsize + (2 << 20)
    vmem_limit = int(max(need, 32 << 20))          # stays within v7x's 64 MiB VMEM

    grid_spec = pltpu.PrefetchScalarGridSpec(
        num_scalar_prefetch=1,                     # token ids -> SMEM
        grid=(B, n_chunks),
        in_specs=[
            pl.BlockSpec(memory_space=pl.ANY),     # embedding table stays in HBM
            pl.BlockSpec((TS, D), lambda b, c, ids_sm: (c, 0)),       # pos chunk
        ],
        out_specs=pl.BlockSpec((1, TS, D), lambda b, c, ids_sm: (b, c, 0)),
        scratch_shapes=[
            pltpu.VMEM((TS, D), out_dtype),        # gathered token rows
            pltpu.SemaphoreType.DMA((1,)),         # shared row-DMA semaphore
        ],
    )

    return pl.pallas_call(
        _combine_kernel,
        out_shape=jax.ShapeDtypeStruct((B, S, D), out_dtype),
        grid_spec=grid_spec,
        compiler_params=pltpu.CompilerParams(
            dimension_semantics=("parallel", "arbitrary"),
            vmem_limit_bytes=vmem_limit,
        ),
    )(ids, token_table, pos)


def make_sinusoidal_pe(max_len, d_model):
    """Standard (non-trainable) sinusoidal positional embedding table."""
    pos = np.arange(max_len, dtype=np.float32)[:, None]          # [L, 1]
    i = np.arange(0, d_model, 2, dtype=np.float32)[None, :]      # [1, D/2]
    div = np.exp(-i * (math.log(10000.0) / d_model))
    pe = np.zeros((max_len, d_model), dtype=np.float32)
    pe[:, 0::2] = np.sin(pos * div)
    pe[:, 1::2] = np.cos(pos * div)
    return jnp.asarray(pe)


if __name__ == "__main__":
    # small, deterministic config
    B, S, D = 2, 8, 32          # batch, seq, hidden
    V, MAX_LEN = 64, 16         # vocab size, max positions

    key = jax.random.PRNGKey(0)
    k_ids, k_tab = jax.random.split(key)

    ids = jax.random.randint(k_ids, (B, S), 0, V, dtype=jnp.int32)
    token_table = (jax.random.normal(k_tab, (V, D), dtype=jnp.float32)
                   * (1.0 / math.sqrt(D)))
    pos_table = make_sinusoidal_pe(MAX_LEN, D)

    out = combine_embedding(ids, token_table, pos_table)
    out = jax.block_until_ready(out)

    # pure-JAX reference: table[x] + pe[:S]
    ref = token_table[ids] + pos_table[:S][None, :, :]
    assert out.shape == (B, S, D)
    assert out.dtype == token_table.dtype
    np.testing.assert_allclose(np.asarray(out), np.asarray(ref), rtol=1e-6, atol=1e-6)

    print("KERNEL_OK")
</pallas_src>

<mosaic_0001>
module attributes {stable_mosaic.version = 11 : i64} {
  func.func @_combine_kernel(%arg0: i32, %arg1: i32, %arg2: memref<2x8xi32, #tpu.memory_space<smem>>, %arg3: memref<64x32xf32, #tpu.memory_space<any>>, %arg4: memref<8x32xf32, #tpu.memory_space<vmem>>, %arg5: memref<1x8x32xf32, #tpu.memory_space<vmem>>, %arg6: memref<8x32xf32, #tpu.memory_space<vmem>>, %arg7: memref<1x!tpu.dma_semaphore, #tpu.memory_space<semaphore_mem>>) attributes {dimension_semantics = [#tpu.dimension_semantics<parallel>, #tpu.dimension_semantics<arbitrary>], iteration_bounds = array<i64: 2, 1>, scalar_prefetch = 1 : i64, scratch_operands = 2 : i64, tpu.core_type = #tpu.core_type<tc>, window_params = [{}, {transform_indices = @transform_1, window_bounds = array<i64: 8, 32>}, {transform_indices = @transform_2, window_bounds = array<i64: 1, 8, 32>}]} {
    %c8_i32 = arith.constant 8 : i32
    %0 = arith.muli %arg1, %c8_i32 : i32
    %c0_i32 = arith.constant 0 : i32
    %c8_i32_0 = arith.constant 8 : i32
    %1 = arith.addi %c0_i32, %c8_i32_0 : i32
    %c1_i32 = arith.constant 1 : i32
    scf.for %arg8 = %c0_i32 to %1 step %c1_i32  : i32 {
      %c1_i32_12 = arith.constant 1 : i32
      %9 = arith.muli %arg8, %c1_i32_12 : i32
      %c0_i32_13 = arith.constant 0 : i32
      %10 = arith.addi %c0_i32_13, %9 : i32
      %11 = arith.addi %0, %10 : i32
      %12 = arith.index_cast %arg0 : i32 to index
      %13 = arith.index_cast %11 : i32 to index
      %14 = memref.load %arg2[%12, %13] : memref<2x8xi32, #tpu.memory_space<smem>>
      %c0_i32_14 = arith.constant 0 : i32
      %15 = arith.maxsi %14, %c0_i32_14 : i32
      %c63_i32 = arith.constant 63 : i32
      %16 = arith.minsi %15, %c63_i32 : i32
      %c0_i32_15 = arith.constant 0 : i32
      %c0_i32_16 = arith.constant 0 : i32
      %17 = tpu.memref_slice %arg3[%16, %c0_i32_16] : memref<64x32xf32, #tpu.memory_space<any>> -> memref<1x32xf32, #tpu.memory_space<any>>
      %c0_i32_17 = arith.constant 0 : i32
      %18 = tpu.memref_slice %arg6[%10, %c0_i32_17] : memref<8x32xf32, #tpu.memory_space<vmem>> -> memref<1x32xf32, #tpu.memory_space<vmem>>
      %19 = tpu.memref_slice %arg7[%c0_i32_15] : memref<1x!tpu.dma_semaphore, #tpu.memory_space<semaphore_mem>> -> memref<1x!tpu.dma_semaphore, #tpu.memory_space<semaphore_mem>>
      %20 = tpu.memref_squeeze %19 : memref<1x!tpu.dma_semaphore, #tpu.memory_space<semaphore_mem>> -> memref<!tpu.dma_semaphore, #tpu.memory_space<semaphore_mem>>
      tpu.enqueue_dma source(%17 : memref<1x32xf32, #tpu.memory_space<any>>) target(%18 : memref<1x32xf32, #tpu.memory_space<vmem>>) target_semaphore(%20 : memref<!tpu.dma_semaphore, #tpu.memory_space<semaphore_mem>>)
    }
    %c8_i32_1 = arith.constant 8 : i32
    %c0_i32_2 = arith.constant 0 : i32
    %c8_i32_3 = arith.constant 8 : i32
    %2 = arith.addi %c0_i32_2, %c8_i32_3 : i32
    %c1_i32_4 = arith.constant 1 : i32
    scf.for %arg8 = %c0_i32_2 to %2 step %c1_i32_4  : i32 {
      %c1_i32_12 = arith.constant 1 : i32
      %9 = arith.muli %arg8, %c1_i32_12 : i32
      %c0_i32_13 = arith.constant 0 : i32
      %10 = arith.addi %c0_i32_13, %9 : i32
      %c0_i32_14 = arith.constant 0 : i32
      %c0_i32_15 = arith.constant 0 : i32
      %c0_i32_16 = arith.constant 0 : i32
      %11 = tpu.memref_slice %arg3[%c0_i32_15, %c0_i32_16] : memref<64x32xf32, #tpu.memory_space<any>> -> memref<1x32xf32, #tpu.memory_space<any>>
      %c0_i32_17 = arith.constant 0 : i32
      %12 = tpu.memref_slice %arg6[%10, %c0_i32_17] : memref<8x32xf32, #tpu.memory_space<vmem>> -> memref<1x32xf32, #tpu.memory_space<vmem>>
      %13 = tpu.memref_slice %arg7[%c0_i32_14] : memref<1x!tpu.dma_semaphore, #tpu.memory_space<semaphore_mem>> -> memref<1x!tpu.dma_semaphore, #tpu.memory_space<semaphore_mem>>
      %14 = tpu.memref_squeeze %13 : memref<1x!tpu.dma_semaphore, #tpu.memory_space<semaphore_mem>> -> memref<!tpu.dma_semaphore, #tpu.memory_space<semaphore_mem>>
      tpu.wait_dma2 semaphore(%14 : memref<!tpu.dma_semaphore, #tpu.memory_space<semaphore_mem>>) src(%11 : memref<1x32xf32, #tpu.memory_space<any>>) dst(%12 : memref<1x32xf32, #tpu.memory_space<vmem>>)
    }
    %c8_i32_5 = arith.constant 8 : i32
    %c0 = arith.constant 0 : index
    %c0_6 = arith.constant 0 : index
    %3 = vector.load %arg6[%c0, %c0_6] : memref<8x32xf32, #tpu.memory_space<vmem>>, vector<8x32xf32>
    %c0_7 = arith.constant 0 : index
    %c0_8 = arith.constant 0 : index
    %4 = vector.load %arg4[%c0_7, %c0_8] : memref<8x32xf32, #tpu.memory_space<vmem>>, vector<8x32xf32>
    %5 = arith.addf %3, %4 : vector<8x32xf32>
    %c0_9 = arith.constant 0 : index
    %c0_10 = arith.constant 0 : index
    %c0_11 = arith.constant 0 : index
    %6 = vector.load %arg5[%c0_9, %c0_10, %c0_11] : memref<1x8x32xf32, #tpu.memory_space<vmem>>, vector<1x8x32xf32>
    %7 = vector.shape_cast %6 : vector<1x8x32xf32> to vector<8x32xf32>
    %8 = vector.shape_cast %5 : vector<8x32xf32> to vector<1x8x32xf32>
    tpu.vector_store %arg5[%c0_9, %c0_10, %c0_11], %8 {strides = array<i32>} : memref<1x8x32xf32, #tpu.memory_space<vmem>>, vector<1x8x32xf32>,
    return
  }
  func.func @transform_1(%arg0: i32, %arg1: i32, %arg2: memref<2x8xi32, #tpu.memory_space<smem>>) -> (i32, i32) {
    %c0_i32 = arith.constant 0 : i32
    %c0_i32_0 = arith.constant 0 : i32
    return %arg1, %c0_i32 : i32, i32
  }
  func.func @transform_2(%arg0: i32, %arg1: i32, %arg2: memref<2x8xi32, #tpu.memory_space<smem>>) -> (i32, i32, i32) {
    %c0_i32 = arith.constant 0 : i32
    %c0_i32_0 = arith.constant 0 : i32
    return %arg0, %arg1, %c0_i32 : i32, i32, i32
  }
}

</mosaic_0001>

<llo_original>
// kernel: tpu_custom_call.1
$region0: #{tpu_custom_call.1}
  #allocation0 [shape = 'u32[]', space=smem, size = 0x4, offset = 0x4, fixed_abs, tag = 'smem constant byte address 0x4 - core index']
  #allocation1 [shape = 'u32[72,128]{1,0:T(1,128)}', space=vmem, size = 0x9000, scoped, tag = 'internal scratch']
  #allocation2 [shape = 'f32[8,32]{1,0:T(8,128)}', space=vmem, size = 0x1000, scoped, tag = 'scratch operand']
  #allocation3 [shape = 's32[1]{0}', space=sflag, size = 0x4, scoped, tag = 'scratch operand']
  #allocation4 [shape = 's32[1]{0}', space=sflag, size = 0x4, scoped, tag = 'scoped memory for tpu_custom_call.1']
  #allocation5 [shape = 'u8[1024]{0}', space=smem, size = 0x400, scoped, tag = 'prefetched SMEM operand 0']
  #allocation8 [shape = 's32[]', space=sflag, size = 0x4, offset = 0, fixed_abs, tag = 'sflag constant byte address 0x0 - dummy sync flag']
  %s0 = inlined_call_operand.vmem [shape: s32[2,8], index: 0, kind: input, shape index: {}]
  %s1 = inlined_call_operand.vmem [shape: f32[64,32], index: 1, kind: input, shape index: {}]
  %s2 = inlined_call_operand.vmem [shape: f32[8,32], index: 2, kind: input, shape index: {}]
  %s3 = inlined_call_operand.hbm [shape: f32[2,8,32], index: 3, kind: output, shape index: {}]
  %s4 = sld [smem:[#allocation0]]
  $region81: #{tpu_custom_call.1} parent=0
    _
  %s6 = ssub.s32 1, %s4
  %s7 = scalar_select 0, %s6, %s4
  %s9 = sshll.u32 %s0, 4
  %s10 = int_to_ptr.vmem [resolvable:$true] %s9
  %12 = dma.vmem_to_smem %s10, 32, [#allocation5], [#allocation4]
  %14 = dma.done [#allocation4], 32
  %15 = sfence
  $region1: #{tpu_custom_call.1} parent=0
    #allocation6 [shape = 'u8[8192]{0}', space=vmem, size = 0x2000, scoped, tag = 'output window, operand 0']
    #allocation7 [shape = 's32[2]{0}', space=sflag, size = 0x8, scoped, tag = 'scoped memory for tpu_custom_call.1']
    %16 = vsyncpa [#allocation7], 0
    %s17 = scalar_lea.sflag [#allocation7], 1
    %18 = vsyncpa %s17, 0
    loop: start=0, step=1, limit=4
    $region2: #{tpu_custom_call.1} parent=1 // loop_pre_header
      _
    $region3: #{tpu_custom_call.1} parent=1 // loop_header
      %s20 = sphi 0, %s24
      %p21 = scmp.ge.s32.totalorder %s20, 4
      %s27 = sphi 0, %s39
      %s28 = sphi 0, %s35
      %s29 = sphi 0, %s27
      %s30 = sphi 0, %s28
      %s31 = sphi 0, %s29
      %s32 = sphi 0, %s30
      %s42 = sphi 0, %s44
      %s45 = sphi 0, %s42
      %s46 = sphi 0, %s45
      %s62 = sphi 0, %s46
      %s70 = sphi 0, %s72
      %s73 = sphi 0, %s70
      %s74 = sphi 0, %s73
      %s90 = sphi 0, %s74
    $region4: #{tpu_custom_call.1} parent=1 // loop_header_branch
      %23 = sbr.rel (%p21) target = $region8
    $region5: #{tpu_custom_call.1} parent=1 // loop_body
      %s25 = ssub.s32 %s20, 1
      %s26 = ssub.s32 %s20, 2
      %s33 = sadd.s32 1, %s28
      %p34 = scmp.ge.s32.totalorder %s33, 1
      %s35 = scalar_select %p34, 0, %s33
      %s36 = sadd.s32 1, %s27
      %s37 = scalar_select %p34, %s36, %s27
      %p38 = scmp.ge.s32.totalorder %s37, 2
      %s39 = scalar_select %p38, 0, %s37
      %s40 = ssub.s32 %s28, %s35
      %p41 = scmp.eq.s32.totalorder %s40, 0
      %s43 = sadd.s32 %s42, 1
      %s44 = scalar_select %p41, %s42, %s43
      %p47 = pneg %p41
      %p48 = scmp.eq.s32.totalorder %s20, 1
      %p49 = por %p47, %p48
      %p50 = scmp.ne.s32.totalorder %s42, %s45
      %p51 = scmp.eq.s32.totalorder %s20, 0
      %p52 = por %p50, %p51
      %p53 = scmp.ne.s32.totalorder %s42, %s45
      %p54 = scmp.eq.s32.totalorder %s25, 1
      %p55 = por %p53, %p54
      %p56 = scmp.ne.s32.totalorder %s45, %s46
      %p57 = scmp.eq.s32.totalorder %s25, 0
      %p58 = por %p56, %p57
      %p59 = scmp.ne.s32.totalorder %s45, %s46
      %p60 = scmp.eq.s32.totalorder %s26, 1
      %p61 = por %p59, %p60
      %p63 = scmp.ne.s32.totalorder %s46, %s62
      %p64 = scmp.eq.s32.totalorder %s26, 0
      %p65 = por %p63, %p64
      %s66 = ssub.s32 %s27, %s39
      %s67 = ssub.s32 %s28, %s35
      %s68 = sor.u32 %s66, %s67
      %p69 = scmp.eq.s32.totalorder %s68, 0
      %s71 = sadd.s32 %s70, 1
      %s72 = scalar_select %p69, %s70, %s71
      %p75 = pneg %p69
      %p76 = scmp.eq.s32.totalorder %s20, 1
      %p77 = por %p75, %p76
      %p78 = scmp.ne.s32.totalorder %s70, %s73
      %p79 = scmp.eq.s32.totalorder %s20, 0
      %p80 = por %p78, %p79
      %p81 = scmp.ne.s32.totalorder %s70, %s73
      %p82 = scmp.eq.s32.totalorder %s25, 1
      %p83 = por %p81, %p82
      %p84 = scmp.ne.s32.totalorder %s73, %s74
      %p85 = scmp.eq.s32.totalorder %s25, 0
      %p86 = por %p84, %p85
      %p87 = scmp.ne.s32.totalorder %s73, %s74
      %p88 = scmp.eq.s32.totalorder %s26, 1
      %p89 = por %p87, %p88
      %p91 = scmp.ne.s32.totalorder %s74, %s90
      %p92 = scmp.eq.s32.totalorder %s26, 0
      %p93 = por %p91, %p92
      %p94 = scmp.le.s32.totalorder 1, %s20
      %p95 = scmp.lt.s32.totalorder %s20, 3
      %p96 = pnand %p94, %p95
      %p97 = pneg %p96
      // Predicated region
      $region9: #{tpu_custom_call.1} parent=5 // pred_check
        _
      $region10: #{tpu_custom_call.1} parent=5 // pred_check_branch
        %99 = sbr.rel (%p96) target = $region12
      $region11: #{tpu_custom_call.1} parent=5 // pred_region
        %s100 = ssub.s32 %s20, 1
        // Predicated region
        $region13: #{tpu_custom_call.1} parent=11 // pred_check
          %p101 = pneg %p58
        $region14: #{tpu_custom_call.1} parent=11 // pred_check_branch
          %103 = sbr.rel (%p101) target = $region16
        $region15: #{tpu_custom_call.1} parent=11 // pred_region
          %p104 = scmp.lt.s32.totalorder %s30, 0
          %s105 = scalar_select %p104, %s30, 0
          %s106 = smul.addr %s105, 8
          %s107 = scalar_lea.vmem %s2, %s106
        $region16: #{tpu_custom_call.1} parent=11 // pred_fallthru
          _
      $region12: #{tpu_custom_call.1} parent=5 // pred_fallthru
        _
      %p108 = scmp.lt.s32.totalorder %s20, 2
      // Predicated region
      $region17: #{tpu_custom_call.1} parent=5 // pred_check
        %p109 = pneg %p108
      $region18: #{tpu_custom_call.1} parent=5 // pred_check_branch
        %111 = sbr.rel (%p109) target = $region20
      $region19: #{tpu_custom_call.1} parent=5 // pred_region
        _
      $region20: #{tpu_custom_call.1} parent=5 // pred_fallthru
        _
      %p112 = scmp.le.s32.totalorder 1, %s20
      %p113 = scmp.lt.s32.totalorder %s20, 3
      %p114 = pnand %p112, %p113
      %p115 = pneg %p114
      // Predicated region
      $region21: #{tpu_custom_call.1} parent=5 // pred_check
        _
      $region22: #{tpu_custom_call.1} parent=5 // pred_check_branch
        %117 = sbr.rel (%p114) target = $region24
      $region23: #{tpu_custom_call.1} parent=5 // pred_region
        %s118 = ssub.s32 %s20, 1
        %p119 = scmp.lt.s32.totalorder %s30, 0
        %s120 = scalar_select %p119, %s30, 0
        %s121 = smul.addr %s120, 8
        %s122 = scalar_lea.vmem %s2, %s121
        %p123 = pneg %p58
        %p124 = pneg %p55
        %p125 = pneg %p86
        %p126 = pneg %p83
        %s127 = sand.u32 %s73, 1
        %s128 = scalar_lea.sflag [#allocation7], %s127
        %s129 = sand.u32 %s73, 1
        %s130 = smul.addr %s129, 8
        %s131 = scalar_lea.vmem [#allocation6], %s130
        %p132 = scmp.lt.s32.totalorder %s30, 0
        %s133 = scalar_select %p132, %s30, 0
        %s134 = smul.addr %s133, 8
        %s135 = scalar_lea.vmem %s2, %s134
        %s136 = smul.u32 %s30, 8
        loop: start=0, step=1, limit=8
        $region25: #{tpu_custom_call.1} parent=23 // loop_pre_header
          _
        $region26: #{tpu_custom_call.1} parent=23 // loop_header
          %s138 = sphi 0, %s142
          %p139 = scmp.ge.s32.totalorder %s138, 8
        $region27: #{tpu_custom_call.1} parent=23 // loop_header_branch
          %141 = sbr.rel (%p139) target = $region31
        $region28: #{tpu_custom_call.1} parent=23 // loop_body
          %s143 = sadd.s32 %s136, %s138
          %s144 = sshra.s32 %s143, 7
          %s145 = sand.u32 %s143, 127
          %s146 = sadd.s32 %s144, %s29
          %s147 = smul.u32 %s146, 128
          %s148 = sshra.s32 %s143, 7
          %s149 = sand.u32 %s143, 127
          %s150 = sadd.s32 %s147, %s149
          %s151 = sld [smem:[#allocation5 + %s150]]
          %p152 = scmp.gt.s32.totalorder %s151, 0
          %s153 = scalar_select %p152, %s151, 0
          %p154 = scmp.lt.s32.totalorder %s153, 63
          %s155 = scalar_select %p154, %s153, 63
          %s156 = scalar_lea.vmem %s1, %s155
          %s157 = scalar_lea.vmem [#allocation2], %s138
          // Predicated region
          $region32: #{tpu_custom_call.1} parent=28 // pred_check
            _
          $region33: #{tpu_custom_call.1} parent=28 // pred_check_branch
            %159 = sbr.rel target = $region35
          $region34: #{tpu_custom_call.1} parent=28 // pred_region
            // Predicated region
            $region47: #{tpu_custom_call.1} parent=34 // pred_check
              _
            $region48: #{tpu_custom_call.1} parent=34 // pred_check_branch
              %175 = sbr.rel (0) target = $region50
            $region49: #{tpu_custom_call.1} parent=34 // pred_region
              %s177 = ssub.s32 2, 1
              loop: start=0, step=1, limit=1
              $region51: #{tpu_custom_call.1} parent=49 // loop_pre_header
                _
              $region52: #{tpu_custom_call.1} parent=49 // loop_header
                %s179 = sphi 0, %s183
                %p180 = scmp.ge.s32.totalorder %s179, 1
                %s184 = sphi %s156, %s156
                %s185 = sphi %s157, %s157
              $region53: #{tpu_custom_call.1} parent=49 // loop_header_branch
                %182 = sbr.rel (%p180) target = $region57
              $region54: #{tpu_custom_call.1} parent=49 // loop_body
                %v186 = vld [vmem:[%s184] sm:%s177]
                %187 = vst [vmem:[%s185] sm:%s177] %v186
              $region55: #{tpu_custom_call.1} parent=49 // loop_footer
                %s183 = sadd.s32 1, %s179
              $region56: #{tpu_custom_call.1} parent=49 // loop_footer_branch
                %178 = sbr.rel target = $region52
              $region57: #{tpu_custom_call.1} parent=49 // loop_exit
                _
            $region50: #{tpu_custom_call.1} parent=34 // pred_fallthru
              _
          $region35: #{tpu_custom_call.1} parent=28 // pred_fallthru
            _
          // Predicated region
          $region36: #{tpu_custom_call.1} parent=28 // pred_check
            _
          $region37: #{tpu_custom_call.1} parent=28 // pred_check_branch
            %161 = sbr.rel (0) target = $region39
          $region38: #{tpu_custom_call.1} parent=28 // pred_region
            %s163 = ssub.s32 2, 1
            loop: start=0, step=1, limit=1
            $region40: #{tpu_custom_call.1} parent=38 // loop_pre_header
              _
            $region41: #{tpu_custom_call.1} parent=38 // loop_header
              %s165 = sphi 0, %s169
              %p166 = scmp.ge.s32.totalorder %s165, 1
              %s170 = sphi %s156, %s156
              %s171 = sphi %s157, %s157
            $region42: #{tpu_custom_call.1} parent=38 // loop_header_branch
              %168 = sbr.rel (%p166) target = $region46
            $region43: #{tpu_custom_call.1} parent=38 // loop_body
              %v172 = vld [vmem:[%s170] sm:%s163]
              %173 = vst [vmem:[%s171] sm:%s163] %v172
            $region44: #{tpu_custom_call.1} parent=38 // loop_footer
              %s169 = sadd.s32 1, %s165
            $region45: #{tpu_custom_call.1} parent=38 // loop_footer_branch
              %164 = sbr.rel target = $region41
            $region46: #{tpu_custom_call.1} parent=38 // loop_exit
              _
          $region39: #{tpu_custom_call.1} parent=28 // pred_fallthru
            _
          // Predicated region
          $region58: #{tpu_custom_call.1} parent=28 // pred_check
            _
          $region59: #{tpu_custom_call.1} parent=28 // pred_check_branch
            %190 = sbr.rel (0) target = $region61
          $region60: #{tpu_custom_call.1} parent=28 // pred_region
            %191 = vsyncadd [#allocation3], 16
          $region61: #{tpu_custom_call.1} parent=28 // pred_fallthru
            _
        $region29: #{tpu_custom_call.1} parent=23 // loop_footer
          %s142 = sadd.s32 1, %s138
        $region30: #{tpu_custom_call.1} parent=23 // loop_footer_branch
          %137 = sbr.rel target = $region26
        $region31: #{tpu_custom_call.1} parent=23 // loop_exit
          _
        loop: start=0, step=1, limit=8
        $region62: #{tpu_custom_call.1} parent=23 // loop_pre_header
          _
        $region63: #{tpu_custom_call.1} parent=23 // loop_header
          %s193 = sphi 0, %s197
          %p194 = scmp.ge.s32.totalorder %s193, 8
        $region64: #{tpu_custom_call.1} parent=23 // loop_header_branch
          %196 = sbr.rel (%p194) target = $region68
        $region65: #{tpu_custom_call.1} parent=23 // loop_body
          %s198 = smul.u32 1, 1
          %s199 = sshll.u32 %s198, 4
          %200 = dma.done [#allocation3], %s199
        $region66: #{tpu_custom_call.1} parent=23 // loop_footer
          %s197 = sadd.s32 1, %s193
        $region67: #{tpu_custom_call.1} parent=23 // loop_footer_branch
          %192 = sbr.rel target = $region63
        $region68: #{tpu_custom_call.1} parent=23 // loop_exit
          _
        %v201 = vld [vmem:[#allocation2] sm:$0xff]
        %v202 = vld [vmem:[%s135] sm:$0xff]
        %v203 = vadd.f32 %v201, %v202
        %vm204 = vcmask 261120
        %205 = vst.msk [vmem:[%s131] sm:$0xff] %vm204, %v203
        %s206 = sand.u32 %s73, 1
        %s207 = scalar_lea.sflag [#allocation7], %s206
        %s208 = sand.u32 %s73, 1
        %s209 = smul.addr %s208, 8
        %s210 = scalar_lea.vmem [#allocation6], %s209
        // Predicated region
        $region69: #{tpu_custom_call.1} parent=23 // pred_check
          %p211 = pneg %p83
        $region70: #{tpu_custom_call.1} parent=23 // pred_check_branch
          %213 = sbr.rel (%p211) target = $region72
        $region71: #{tpu_custom_call.1} parent=23 // pred_region
          %215 = vsyncadd %s207, 0
          %s216 = sadd.s32 %s30, %s29
          %s217 = smul.addr %s216, 8
          %s218 = scalar_lea.hbm %s3, %s217
          %s220 = sshll.u32 %s210, 4
          %s221 = int_to_ptr.vmem [resolvable:$true] %s220
          %s222 = sshll.u32 %s218, 4
          %s223 = int_to_ptr.hbm [resolvable:$true] %s222
          %225 = dma.vmem_to_hbm [thread:$0]  %s221, 128, %s223, %s207
        $region72: #{tpu_custom_call.1} parent=23 // pred_fallthru
          _
      $region24: #{tpu_custom_call.1} parent=5 // pred_fallthru
        _
      %p226 = scmp.le.s32.totalorder 2, %s20
      // Predicated region
      $region73: #{tpu_custom_call.1} parent=5 // pred_check
        %p227 = pneg %p226
      $region74: #{tpu_custom_call.1} parent=5 // pred_check_branch
        %229 = sbr.rel (%p227) target = $region76
      $region75: #{tpu_custom_call.1} parent=5 // pred_region
        %s230 = ssub.s32 %s20, 2
        // Predicated region
        $region77: #{tpu_custom_call.1} parent=75 // pred_check
          %p231 = pneg %p89
        $region78: #{tpu_custom_call.1} parent=75 // pred_check_branch
          %233 = sbr.rel (%p231) target = $region80
        $region79: #{tpu_custom_call.1} parent=75 // pred_region
          %s234 = sand.u32 %s74, 1
          %s235 = scalar_lea.sflag [#allocation7], %s234
          %s236 = sand.u32 %s74, 1
          %s237 = smul.addr %s236, 8
          %s238 = scalar_lea.vmem [#allocation6], %s237
          %240 = dma.done %s235, 128
        $region80: #{tpu_custom_call.1} parent=75 // pred_fallthru
          _
      $region76: #{tpu_custom_call.1} parent=5 // pred_fallthru
        _
    $region6: #{tpu_custom_call.1} parent=1 // loop_footer
      %s24 = sadd.s32 1, %s20
    $region7: #{tpu_custom_call.1} parent=1 // loop_footer_branch
      %19 = sbr.rel target = $region3
    $region8: #{tpu_custom_call.1} parent=1 // loop_exit
      _
    %241 = vsyncpa [#allocation7], 1
    %s242 = scalar_lea.sflag [#allocation7], 1
    %243 = vsyncpa %s242, 1
  %244 = vsyncmov [#allocation3]
  %s245 = vpop.sfrf %244
  %p246 = scmp.eq.s32.totalorder %s245, 0
  %p247 = pneg %p246
  %249 = shalt.err (%p247)

</llo_original>
